<compile_context>
chip_gen: v6e
topology: v6e:2x2x1
jax: 0.10.0
libtpu: 0.0.40
codegen_flags: <defaults>
</compile_context>

<pallas_src>
import functools

import jax
import jax.numpy as jnp
from jax import lax
from jax.experimental import pallas as pl
from jax.experimental.pallas import tpu as pltpu


_ACTS = ("relu", "relu", "tanh", "relu", "relu", "tanh")


def _round_up(n, m):
    return ((n + m - 1) // m) * m


def _mlp_kernel(x_ref, w_ref, b_ref, out_ref, *, in_dim, out_dim, precision):
    # x_ref:  (tile, in_dim)   native-width input tile (no lane padding in HBM)
    # w_ref:  (L, P, P)        all 6 layer weights, pre-transposed + zero-padded
    # b_ref:  (L, 1, P)        all 6 layer biases, zero-padded (f32)
    # out_ref:(tile, out_dim)  true-width output tile
    h = x_ref[...]
    for l, act in enumerate(_ACTS):          # statically unrolled (6 layers)
        # Layer 0 contracts only over the true in_dim rows (static slice);
        # later layers use the full padded (P, P) weight -- padded rows/cols
        # are zero and relu(0)=tanh(0)=0, so valid lanes stay exact.
        w = w_ref[0, :in_dim, :] if l == 0 else w_ref[l]
        h = jnp.dot(h.astype(w.dtype), w,
                    preferred_element_type=jnp.float32, precision=precision)
        h = h + b_ref[l].astype(jnp.float32)      # bias + activation in f32
        h = jnp.maximum(h, 0.0) if act == "relu" else jnp.tanh(h)
    out_ref[...] = h[:, :out_dim].astype(out_ref.dtype)


def _pad2(a, rows, cols):
    out = jnp.zeros((rows, cols), a.dtype)
    return out.at[: a.shape[0], : a.shape[1]].set(a)


def prepare_params(params, compute_dtype=jnp.bfloat16):
    """Pad + stack all layer weights/biases ONCE (hoisted out of the forward).

    params: list of (W, b) with W shape (in_dim, out_dim) (already transposed
    vs torch's (out, in) layout) and b shape (1, out_dim).
    Returns (w_slab, b_slab, out_dim) to pass to mlp2layers_tanh.
    """
    in_dim = params[0][0].shape[0]
    out_dim = params[-1][0].shape[1]
    all_dims = [in_dim] + [w.shape[1] for (w, _) in params]
    P = _round_up(max(all_dims), 128)        # common lane-dense width (128 here)
    w_slab = jnp.stack([_pad2(w, P, P) for (w, _) in params]).astype(compute_dtype)
    b_slab = jnp.stack([_pad2(b, 1, P) for (_, b) in params]).astype(jnp.float32)
    return w_slab, b_slab, out_dim


@functools.partial(jax.jit, static_argnames=("out_dim", "batch_tile"))
def _mlp_forward(x, w_slab, b_slab, *, out_dim, batch_tile):
    B, in_dim = x.shape
    n_layers, P, _ = w_slab.shape

    Bp = _round_up(B, batch_tile)
    x_pad = x if Bp == B else jnp.pad(x, ((0, Bp - B), (0, 0)))
    grid = (Bp // batch_tile,)

    precision = (lax.Precision.HIGHEST if w_slab.dtype == jnp.float32
                 else lax.Precision.DEFAULT)
    kernel = functools.partial(_mlp_kernel, in_dim=in_dim, out_dim=out_dim,
                               precision=precision)

    out = pl.pallas_call(
        kernel,
        out_shape=jax.ShapeDtypeStruct((Bp, out_dim), x.dtype),
        grid=grid,
        in_specs=[
            # Native-width input block: last block dim == full array dim.
            pl.BlockSpec((batch_tile, in_dim), lambda i: (i, 0)),
            # Constant block index -> fetched once, resident across grid steps.
            pl.BlockSpec((n_layers, P, P), lambda i: (0, 0, 0)),
            pl.BlockSpec((n_layers, 1, P), lambda i: (0, 0, 0)),
        ],
        # True-width output (lane-masked store beats a 128-wide store plus a
        # post-kernel slice pass over the whole slab).
        out_specs=pl.BlockSpec((batch_tile, out_dim), lambda i: (i, 0)),
        compiler_params=pltpu.CompilerParams(
            dimension_semantics=("parallel",)),
    )(x_pad, w_slab, b_slab)

    return out if Bp == B else out[:B]


def mlp2layers_tanh(x, prepared, batch_tile=None):
    """Forward pass. prepared = prepare_params(params)."""
    w_slab, b_slab, out_dim = prepared
    B = x.shape[0]
    row_align = 16 if x.dtype == jnp.bfloat16 else 8
    if batch_tile is None:
        # Big tiles amortize per-step overhead; >= 2 grid steps keeps both v7x
        # TensorCores busy; never over-pads a small batch.
        batch_tile = min(2048, _round_up(max(1, (B + 1) // 2), row_align))
    batch_tile = _round_up(max(batch_tile, row_align), row_align)
    return _mlp_forward(x, w_slab, b_slab, out_dim=out_dim, batch_tile=batch_tile)


def _xavier_uniform(key, fan_in, fan_out, dtype=jnp.float32):
    bound = (6.0 / (fan_in + fan_out)) ** 0.5
    # Stored already transposed: (in_dim, out_dim), so the kernel does x @ W + b.
    return jax.random.uniform(key, (fan_in, fan_out), dtype, -bound, bound)


def _linear_bias(key, fan_in, fan_out, dtype=jnp.float32):
    # PyTorch nn.Linear default bias init: U(-1/sqrt(fan_in), 1/sqrt(fan_in)).
    bound = 1.0 / (fan_in ** 0.5)
    return jax.random.uniform(key, (1, fan_out), dtype, -bound, bound)


def init_params(key, dims):
    """dims = [in_feature1, out1, out2, out3, out4, out5, out6]."""
    params = []
    for i in range(len(dims) - 1):
        key, kw, kb = jax.random.split(key, 3)
        params.append((_xavier_uniform(kw, dims[i], dims[i + 1]),
                       _linear_bias(kb, dims[i], dims[i + 1])))
    return params


def _reference(x, params):
    h = x
    for (w, b), act in zip(params, _ACTS):
        h = jnp.dot(h, w, precision=lax.Precision.HIGHEST) + b
        h = jnp.maximum(h, 0.0) if act == "relu" else jnp.tanh(h)
    return h


if __name__ == "__main__":
    # Shapes consistent with the module:
    # in_feature1=16, out_features = 32, 64, 32, 64, 32, 8
    dims = [16, 32, 64, 32, 64, 32, 8]
    batch = 16

    key = jax.random.PRNGKey(0)
    kx, kp = jax.random.split(key)
    x = jax.random.normal(kx, (batch, dims[0]), jnp.float32)
    params = init_params(kp, dims)
    ref = _reference(x, params)

    # Default (fast) path: bf16 matmul operands, f32 accumulation.
    prepared_bf16 = prepare_params(params)
    out = jax.block_until_ready(mlp2layers_tanh(x, prepared_bf16))
    assert out.shape == (batch, dims[-1])
    assert jnp.allclose(out, ref, atol=5e-2, rtol=5e-2), "bf16 path mismatch"

    # Strict f32 path (precision=HIGHEST) for numerical parity with torch.
    prepared_f32 = prepare_params(params, compute_dtype=jnp.float32)
    out32 = jax.block_until_ready(mlp2layers_tanh(x, prepared_f32))
    assert jnp.allclose(out32, ref, atol=1e-4, rtol=1e-4), "f32 path mismatch"

    # Non-divisible batch: tail handled via row padding, not dropped.
    x2 = jax.random.normal(kx, (13, dims[0]), jnp.float32)
    out2 = jax.block_until_ready(mlp2layers_tanh(x2, prepared_f32))
    assert out2.shape == (13, dims[-1])
    assert jnp.allclose(out2, _reference(x2, params), atol=1e-4, rtol=1e-4)

    print("KERNEL_OK")
</pallas_src>

<mosaic_0001>
module attributes {stable_mosaic.version = 11 : i64} {
  func.func @_mlp_kernel(%arg0: i32, %arg1: memref<8x16xf32, #tpu.memory_space<vmem>>, %arg2: memref<6x128x128xbf16, #tpu.memory_space<vmem>>, %arg3: memref<6x1x128xf32, #tpu.memory_space<vmem>>, %arg4: memref<8x8xf32, #tpu.memory_space<vmem>>) attributes {dimension_semantics = [#tpu.dimension_semantics<parallel>], iteration_bounds = array<i64: 2>, scalar_prefetch = 0 : i64, scratch_operands = 0 : i64, tpu.core_type = #tpu.core_type<tc>, window_params = [{transform_indices = @transform_0, window_bounds = array<i64: 8, 16>}, {pipeline_mode = #tpu.pipeline_mode<synchronous>, transform_indices = @transform_1, window_bounds = array<i64: 6, 128, 128>}, {pipeline_mode = #tpu.pipeline_mode<synchronous>, transform_indices = @transform_2, window_bounds = array<i64: 6, 1, 128>}, {transform_indices = @transform_3, window_bounds = array<i64: 8, 8>}]} {
    %c0 = arith.constant 0 : index
    %c0_0 = arith.constant 0 : index
    %0 = vector.load %arg1[%c0, %c0_0] : memref<8x16xf32, #tpu.memory_space<vmem>>, vector<8x16xf32>
    %c0_1 = arith.constant 0 : index
    %c0_2 = arith.constant 0 : index
    %c0_3 = arith.constant 0 : index
    %1 = vector.load %arg2[%c0_1, %c0_2, %c0_3] : memref<6x128x128xbf16, #tpu.memory_space<vmem>>, vector<1x16x128xbf16>
    %2 = vector.shape_cast %1 : vector<1x16x128xbf16> to vector<16x128xbf16>
    %3 = arith.truncf %0 : vector<8x16xf32> to vector<8x16xbf16>
    %cst = arith.constant dense<0.000000e+00> : vector<8x128xf32>
    %4 = tpu.matmul %3, %2, %cst {dimension_numbers = #tpu.dot_dimension_numbers<[1], [0], [0], [1], [0, 0, 1, 1], [], []>} : vector<8x16xbf16>, vector<16x128xbf16>, vector<8x128xf32> -> vector<8x128xf32>
    %c0_4 = arith.constant 0 : index
    %c0_5 = arith.constant 0 : index
    %c0_6 = arith.constant 0 : index
    %5 = vector.load %arg3[%c0_4, %c0_5, %c0_6] : memref<6x1x128xf32, #tpu.memory_space<vmem>>, vector<1x1x128xf32>
    %6 = vector.shape_cast %5 : vector<1x1x128xf32> to vector<1x128xf32>
    %7 = vector.broadcast %6 : vector<1x128xf32> to vector<8x128xf32>
    %8 = arith.addf %4, %7 : vector<8x128xf32>
    %cst_7 = arith.constant 0.000000e+00 : f32
    %9 = vector.broadcast %cst_7 : f32 to vector<8x128xf32>
    %10 = arith.maximumf %8, %9 : vector<8x128xf32>
    %c1 = arith.constant 1 : index
    %c0_8 = arith.constant 0 : index
    %c0_9 = arith.constant 0 : index
    %11 = vector.load %arg2[%c1, %c0_8, %c0_9] : memref<6x128x128xbf16, #tpu.memory_space<vmem>>, vector<1x128x128xbf16>
    %12 = vector.shape_cast %11 : vector<1x128x128xbf16> to vector<128x128xbf16>
    %13 = arith.truncf %10 : vector<8x128xf32> to vector<8x128xbf16>
    %cst_10 = arith.constant dense<0.000000e+00> : vector<8x128xf32>
    %14 = tpu.matmul %13, %12, %cst_10 {dimension_numbers = #tpu.dot_dimension_numbers<[1], [0], [0], [1], [0, 0, 1, 1], [], []>} : vector<8x128xbf16>, vector<128x128xbf16>, vector<8x128xf32> -> vector<8x128xf32>
    %c1_11 = arith.constant 1 : index
    %c0_12 = arith.constant 0 : index
    %c0_13 = arith.constant 0 : index
    %15 = vector.load %arg3[%c1_11, %c0_12, %c0_13] : memref<6x1x128xf32, #tpu.memory_space<vmem>>, vector<1x1x128xf32>
    %16 = vector.shape_cast %15 : vector<1x1x128xf32> to vector<1x128xf32>
    %17 = vector.broadcast %16 : vector<1x128xf32> to vector<8x128xf32>
    %18 = arith.addf %14, %17 : vector<8x128xf32>
    %cst_14 = arith.constant 0.000000e+00 : f32
    %19 = vector.broadcast %cst_14 : f32 to vector<8x128xf32>
    %20 = arith.maximumf %18, %19 : vector<8x128xf32>
    %c2 = arith.constant 2 : index
    %c0_15 = arith.constant 0 : index
    %c0_16 = arith.constant 0 : index
    %21 = vector.load %arg2[%c2, %c0_15, %c0_16] : memref<6x128x128xbf16, #tpu.memory_space<vmem>>, vector<1x128x128xbf16>
    %22 = vector.shape_cast %21 : vector<1x128x128xbf16> to vector<128x128xbf16>
    %23 = arith.truncf %20 : vector<8x128xf32> to vector<8x128xbf16>
    %cst_17 = arith.constant dense<0.000000e+00> : vector<8x128xf32>
    %24 = tpu.matmul %23, %22, %cst_17 {dimension_numbers = #tpu.dot_dimension_numbers<[1], [0], [0], [1], [0, 0, 1, 1], [], []>} : vector<8x128xbf16>, vector<128x128xbf16>, vector<8x128xf32> -> vector<8x128xf32>
    %c2_18 = arith.constant 2 : index
    %c0_19 = arith.constant 0 : index
    %c0_20 = arith.constant 0 : index
    %25 = vector.load %arg3[%c2_18, %c0_19, %c0_20] : memref<6x1x128xf32, #tpu.memory_space<vmem>>, vector<1x1x128xf32>
    %26 = vector.shape_cast %25 : vector<1x1x128xf32> to vector<1x128xf32>
    %27 = vector.broadcast %26 : vector<1x128xf32> to vector<8x128xf32>
    %28 = arith.addf %24, %27 : vector<8x128xf32>
    %29 = math.tanh %28 : vector<8x128xf32>
    %c3 = arith.constant 3 : index
    %c0_21 = arith.constant 0 : index
    %c0_22 = arith.constant 0 : index
    %30 = vector.load %arg2[%c3, %c0_21, %c0_22] : memref<6x128x128xbf16, #tpu.memory_space<vmem>>, vector<1x128x128xbf16>
    %31 = vector.shape_cast %30 : vector<1x128x128xbf16> to vector<128x128xbf16>
    %32 = arith.truncf %29 : vector<8x128xf32> to vector<8x128xbf16>
    %cst_23 = arith.constant dense<0.000000e+00> : vector<8x128xf32>
    %33 = tpu.matmul %32, %31, %cst_23 {dimension_numbers = #tpu.dot_dimension_numbers<[1], [0], [0], [1], [0, 0, 1, 1], [], []>} : vector<8x128xbf16>, vector<128x128xbf16>, vector<8x128xf32> -> vector<8x128xf32>
    %c3_24 = arith.constant 3 : index
    %c0_25 = arith.constant 0 : index
    %c0_26 = arith.constant 0 : index
    %34 = vector.load %arg3[%c3_24, %c0_25, %c0_26] : memref<6x1x128xf32, #tpu.memory_space<vmem>>, vector<1x1x128xf32>
    %35 = vector.shape_cast %34 : vector<1x1x128xf32> to vector<1x128xf32>
    %36 = vector.broadcast %35 : vector<1x128xf32> to vector<8x128xf32>
    %37 = arith.addf %33, %36 : vector<8x128xf32>
    %cst_27 = arith.constant 0.000000e+00 : f32
    %38 = vector.broadcast %cst_27 : f32 to vector<8x128xf32>
    %39 = arith.maximumf %37, %38 : vector<8x128xf32>
    %c4 = arith.constant 4 : index
    %c0_28 = arith.constant 0 : index
    %c0_29 = arith.constant 0 : index
    %40 = vector.load %arg2[%c4, %c0_28, %c0_29] : memref<6x128x128xbf16, #tpu.memory_space<vmem>>, vector<1x128x128xbf16>
    %41 = vector.shape_cast %40 : vector<1x128x128xbf16> to vector<128x128xbf16>
    %42 = arith.truncf %39 : vector<8x128xf32> to vector<8x128xbf16>
    %cst_30 = arith.constant dense<0.000000e+00> : vector<8x128xf32>
    %43 = tpu.matmul %42, %41, %cst_30 {dimension_numbers = #tpu.dot_dimension_numbers<[1], [0], [0], [1], [0, 0, 1, 1], [], []>} : vector<8x128xbf16>, vector<128x128xbf16>, vector<8x128xf32> -> vector<8x128xf32>
    %c4_31 = arith.constant 4 : index
    %c0_32 = arith.constant 0 : index
    %c0_33 = arith.constant 0 : index
    %44 = vector.load %arg3[%c4_31, %c0_32, %c0_33] : memref<6x1x128xf32, #tpu.memory_space<vmem>>, vector<1x1x128xf32>
    %45 = vector.shape_cast %44 : vector<1x1x128xf32> to vector<1x128xf32>
    %46 = vector.broadcast %45 : vector<1x128xf32> to vector<8x128xf32>
    %47 = arith.addf %43, %46 : vector<8x128xf32>
    %cst_34 = arith.constant 0.000000e+00 : f32
    %48 = vector.broadcast %cst_34 : f32 to vector<8x128xf32>
    %49 = arith.maximumf %47, %48 : vector<8x128xf32>
    %c5 = arith.constant 5 : index
    %c0_35 = arith.constant 0 : index
    %c0_36 = arith.constant 0 : index
    %50 = vector.load %arg2[%c5, %c0_35, %c0_36] : memref<6x128x128xbf16, #tpu.memory_space<vmem>>, vector<1x128x128xbf16>
    %51 = vector.shape_cast %50 : vector<1x128x128xbf16> to vector<128x128xbf16>
    %52 = arith.truncf %49 : vector<8x128xf32> to vector<8x128xbf16>
    %cst_37 = arith.constant dense<0.000000e+00> : vector<8x128xf32>
    %53 = tpu.matmul %52, %51, %cst_37 {dimension_numbers = #tpu.dot_dimension_numbers<[1], [0], [0], [1], [0, 0, 1, 1], [], []>} : vector<8x128xbf16>, vector<128x128xbf16>, vector<8x128xf32> -> vector<8x128xf32>
    %c5_38 = arith.constant 5 : index
    %c0_39 = arith.constant 0 : index
    %c0_40 = arith.constant 0 : index
    %54 = vector.load %arg3[%c5_38, %c0_39, %c0_40] : memref<6x1x128xf32, #tpu.memory_space<vmem>>, vector<1x1x128xf32>
    %55 = vector.shape_cast %54 : vector<1x1x128xf32> to vector<1x128xf32>
    %56 = vector.broadcast %55 : vector<1x128xf32> to vector<8x128xf32>
    %57 = arith.addf %53, %56 : vector<8x128xf32>
    %58 = math.tanh %57 : vector<8x128xf32>
    %59 = vector.extract_strided_slice %58 {offsets = [0, 0], sizes = [8, 8], strides = [1, 1]} : vector<8x128xf32> to vector<8x8xf32>
    %c0_41 = arith.constant 0 : index
    %c0_42 = arith.constant 0 : index
    %60 = vector.load %arg4[%c0_41, %c0_42] : memref<8x8xf32, #tpu.memory_space<vmem>>, vector<8x8xf32>
    tpu.vector_store %arg4[%c0_41, %c0_42], %59 {strides = array<i32>} : memref<8x8xf32, #tpu.memory_space<vmem>>, vector<8x8xf32>,
    return
  }
  func.func @transform_0(%arg0: i32) -> (i32, i32) {
    %c0_i32 = arith.constant 0 : i32
    %c0_i32_0 = arith.constant 0 : i32
    return %arg0, %c0_i32 : i32, i32
  }
  func.func @transform_1(%arg0: i32) -> (i32, i32, i32) {
    %c0_i32 = arith.constant 0 : i32
    %c0_i32_0 = arith.constant 0 : i32
    %c0_i32_1 = arith.constant 0 : i32
    %c0_i32_2 = arith.constant 0 : i32
    return %c0_i32, %c0_i32_0, %c0_i32_1 : i32, i32, i32
  }
  func.func @transform_2(%arg0: i32) -> (i32, i32, i32) {
    %c0_i32 = arith.constant 0 : i32
    %c0_i32_0 = arith.constant 0 : i32
    %c0_i32_1 = arith.constant 0 : i32
    %c0_i32_2 = arith.constant 0 : i32
    return %c0_i32, %c0_i32_0, %c0_i32_1 : i32, i32, i32
  }
  func.func @transform_3(%arg0: i32) -> (i32, i32) {
    %c0_i32 = arith.constant 0 : i32
    %c0_i32_0 = arith.constant 0 : i32
    return %arg0, %c0_i32 : i32, i32
  }
}

</mosaic_0001>

<llo_original>
// kernel: _mlp_forward.1
$region0: #{_mlp_forward.1}
  #allocation0 [shape = 'u32[]', space=smem, size = 0x4, offset = 0x4, fixed_abs, tag = 'smem constant byte address 0x4 - core index']
  #allocation1 [shape = 'u32[144,128]{1,0:T(1,128)}', space=vmem, size = 0x12000, scoped, tag = 'internal scratch']
  %s0 = inlined_call_operand.hbm [shape: f32[16,16], index: 0, kind: input, shape index: {}]
  %s1 = inlined_call_operand.hbm [shape: bf16[6,128,128], index: 1, kind: input, shape index: {}]
  %s2 = inlined_call_operand.hbm [shape: f32[6,1,128], index: 2, kind: input, shape index: {}]
  %s3 = inlined_call_operand.vmem [shape: f32[16,8], index: 3, kind: output, shape index: {}]
  %s4 = sld [smem:[#allocation0]]
  $region57: #{_mlp_forward.1} parent=0
    _
  %s6 = ssub.s32 1, %s4
  %s7 = scalar_select 0, %s6, %s4
  $region1: #{_mlp_forward.1} parent=0
    #allocation2 [shape = 'u8[8192]{0}', space=vmem, size = 0x2000, scoped, tag = 'input window, operand 0']
    #allocation3 [shape = 's32[2]{0}', space=sflag, size = 0x8, scoped, tag = 'scoped memory for _mlp_forward.1']
    #allocation4 [shape = 'u8[196608]{0}', space=vmem, size = 0x30000, scoped, tag = 'input window, operand 1, single buffered']
    #allocation5 [shape = 's32[1]{0}', space=sflag, size = 0x4, scoped, tag = 'scoped memory for _mlp_forward.1']
    #allocation6 [shape = 'u8[3072]{0}', space=vmem, size = 0xc00, scoped, tag = 'input window, operand 2, single buffered']
    %8 = vsyncpa [#allocation3], 0
    %s9 = scalar_lea.sflag [#allocation3], 1
    %10 = vsyncpa %s9, 0
    %11 = vsyncpa [#allocation5], 0
    loop: start=0, step=1, limit=4
    $region2: #{_mlp_forward.1} parent=1 // loop_pre_header
      _
    $region3: #{_mlp_forward.1} parent=1 // loop_header
      %s13 = sphi 0, %s17
      %p14 = scmp.ge.s32.totalorder %s13, 4
      %s23 = sphi 0, %s25
      %s26 = sphi 0, %s23
      %s27 = sphi 0, %s26
      %s43 = sphi 0, %s27
      %s47 = sphi 0, %s47
      %s49 = sphi 0, %s47
      %s50 = sphi 0, %s49
      %s64 = sphi 0, %s50
      %s68 = sphi 0, %s68
      %s70 = sphi 0, %s68
      %s71 = sphi 0, %s70
      %s85 = sphi 0, %s71
      %s91 = sphi 0, %s93
      %s94 = sphi 0, %s91
      %s95 = sphi 0, %s94
      %s111 = sphi 0, %s95
    $region4: #{_mlp_forward.1} parent=1 // loop_header_branch
      %16 = sbr.rel (%p14) target = $region8
    $region5: #{_mlp_forward.1} parent=1 // loop_body
      %s18 = ssub.s32 %s13, 1
      %s19 = ssub.s32 %s13, 2
      %s20 = sadd.s32 %s13, 1
      %s21 = ssub.s32 %s13, %s20
      %p22 = scmp.eq.s32.totalorder %s21, 0
      %s24 = sadd.s32 %s23, 1
      %s25 = scalar_select %p22, %s23, %s24
      %p28 = pneg %p22
      %p29 = scmp.eq.s32.totalorder %s13, 1
      %p30 = por %p28, %p29
      %p31 = scmp.ne.s32.totalorder %s23, %s26
      %p32 = scmp.eq.s32.totalorder %s13, 0
      %p33 = por %p31, %p32
      %p34 = scmp.ne.s32.totalorder %s23, %s26
      %p35 = scmp.eq.s32.totalorder %s18, 1
      %p36 = por %p34, %p35
      %p37 = scmp.ne.s32.totalorder %s26, %s27
      %p38 = scmp.eq.s32.totalorder %s18, 0
      %p39 = por %p37, %p38
      %p40 = scmp.ne.s32.totalorder %s26, %s27
      %p41 = scmp.eq.s32.totalorder %s19, 1
      %p42 = por %p40, %p41
      %p44 = scmp.ne.s32.totalorder %s27, %s43
      %p45 = scmp.eq.s32.totalorder %s19, 0
      %p46 = por %p44, %p45
      %s48 = sadd.s32 %s47, 1
      %p51 = scmp.eq.s32.totalorder %s13, 1
      %p52 = scmp.ne.s32.totalorder %s47, %s49
      %p53 = scmp.eq.s32.totalorder %s13, 0
      %p54 = por %p52, %p53
      %p55 = scmp.ne.s32.totalorder %s47, %s49
      %p56 = scmp.eq.s32.totalorder %s18, 1
      %p57 = por %p55, %p56
      %p58 = scmp.ne.s32.totalorder %s49, %s50
      %p59 = scmp.eq.s32.totalorder %s18, 0
      %p60 = por %p58, %p59
      %p61 = scmp.ne.s32.totalorder %s49, %s50
      %p62 = scmp.eq.s32.totalorder %s19, 1
      %p63 = por %p61, %p62
      %p65 = scmp.ne.s32.totalorder %s50, %s64
      %p66 = scmp.eq.s32.totalorder %s19, 0
      %p67 = por %p65, %p66
      %s69 = sadd.s32 %s68, 1
      %p72 = scmp.eq.s32.totalorder %s13, 1
      %p73 = scmp.ne.s32.totalorder %s68, %s70
      %p74 = scmp.eq.s32.totalorder %s13, 0
      %p75 = por %p73, %p74
      %p76 = scmp.ne.s32.totalorder %s68, %s70
      %p77 = scmp.eq.s32.totalorder %s18, 1
      %p78 = por %p76, %p77
      %p79 = scmp.ne.s32.totalorder %s70, %s71
      %p80 = scmp.eq.s32.totalorder %s18, 0
      %p81 = por %p79, %p80
      %p82 = scmp.ne.s32.totalorder %s70, %s71
      %p83 = scmp.eq.s32.totalorder %s19, 1
      %p84 = por %p82, %p83
      %p86 = scmp.ne.s32.totalorder %s71, %s85
      %p87 = scmp.eq.s32.totalorder %s19, 0
      %p88 = por %p86, %p87
      %s89 = ssub.s32 %s13, %s20
      %p90 = scmp.eq.s32.totalorder %s89, 0
      %s92 = sadd.s32 %s91, 1
      %s93 = scalar_select %p90, %s91, %s92
      %p96 = pneg %p90
      %p97 = scmp.eq.s32.totalorder %s13, 1
      %p98 = por %p96, %p97
      %p99 = scmp.ne.s32.totalorder %s91, %s94
      %p100 = scmp.eq.s32.totalorder %s13, 0
      %p101 = por %p99, %p100
      %p102 = scmp.ne.s32.totalorder %s91, %s94
      %p103 = scmp.eq.s32.totalorder %s18, 1
      %p104 = por %p102, %p103
      %p105 = scmp.ne.s32.totalorder %s94, %s95
      %p106 = scmp.eq.s32.totalorder %s18, 0
      %p107 = por %p105, %p106
      %p108 = scmp.ne.s32.totalorder %s94, %s95
      %p109 = scmp.eq.s32.totalorder %s19, 1
      %p110 = por %p108, %p109
      %p112 = scmp.ne.s32.totalorder %s95, %s111
      %p113 = scmp.eq.s32.totalorder %s19, 0
      %p114 = por %p112, %p113
      %p115 = scmp.le.s32.totalorder 1, %s13
      %p116 = scmp.lt.s32.totalorder %s13, 3
      %p117 = pnand %p115, %p116
      %p118 = pneg %p117
      // Predicated region
      $region9: #{_mlp_forward.1} parent=5 // pred_check
        _
      $region10: #{_mlp_forward.1} parent=5 // pred_check_branch
        %120 = sbr.rel (%p117) target = $region12
      $region11: #{_mlp_forward.1} parent=5 // pred_region
        %s121 = ssub.s32 %s13, 1
        // Predicated region
        $region13: #{_mlp_forward.1} parent=11 // pred_check
          %p122 = pneg %p60
        $region14: #{_mlp_forward.1} parent=11 // pred_check_branch
          %124 = sbr.rel (%p122) target = $region16
        $region15: #{_mlp_forward.1} parent=11 // pred_region
          %s126 = ssub.s32 6144, 6144
          %127 = vsyncadd [#allocation5], %s126
          %s128 = sshll.u32 [#allocation4], 4
          %s129 = int_to_ptr.vmem [resolvable:$true] %s128
          %134 = dma.hbm_to_vmem [thread:$0]  %s1, 6144, %s129, [#allocation5], 64, 64, 4
        $region16: #{_mlp_forward.1} parent=11 // pred_fallthru
          _
        // Predicated region
        $region17: #{_mlp_forward.1} parent=11 // pred_check
          %p135 = pneg %p81
        $region18: #{_mlp_forward.1} parent=11 // pred_check_branch
          %137 = sbr.rel (%p135) target = $region20
        $region19: #{_mlp_forward.1} parent=11 // pred_region
          %s139 = ssub.s32 96, 96
          %140 = vsyncadd [#allocation5], %s139
          %s141 = sshll.u32 [#allocation6], 4
          %s142 = int_to_ptr.vmem [resolvable:$true] %s141
          %147 = dma.hbm_to_vmem [thread:$0]  %s2, 96, %s142, [#allocation5], 16, 16, 1
        $region20: #{_mlp_forward.1} parent=11 // pred_fallthru
          _
      $region12: #{_mlp_forward.1} parent=5 // pred_fallthru
        _
      %p148 = scmp.lt.s32.totalorder %s13, 2
      // Predicated region
      $region21: #{_mlp_forward.1} parent=5 // pred_check
        %p149 = pneg %p148
      $region22: #{_mlp_forward.1} parent=5 // pred_check_branch
        %151 = sbr.rel (%p149) target = $region24
      $region23: #{_mlp_forward.1} parent=5 // pred_region
        // Predicated region
        $region25: #{_mlp_forward.1} parent=23 // pred_check
          %p152 = pneg %p33
        $region26: #{_mlp_forward.1} parent=23 // pred_check_branch
          %154 = sbr.rel (%p152) target = $region28
        $region27: #{_mlp_forward.1} parent=23 // pred_region
          %s155 = sand.u32 %s23, 1
          %s156 = scalar_lea.sflag [#allocation3], %s155
          %s157 = sand.u32 %s23, 1
          %s158 = smul.addr %s157, 8
          %s159 = scalar_lea.vmem [#allocation2], %s158
          %s161 = ssub.s32 128, 128
          %162 = vsyncadd %s156, %s161
          %s163 = smul.addr %s13, 128
          %s164 = scalar_lea.hbm %s0, %s163
          %s166 = sshll.u32 %s159, 4
          %s167 = int_to_ptr.vmem [resolvable:$true] %s166
          %169 = dma.hbm_to_vmem [thread:$0]  %s164, 128, %s167, %s156
        $region28: #{_mlp_forward.1} parent=23 // pred_fallthru
          _
      $region24: #{_mlp_forward.1} parent=5 // pred_fallthru
        _
      %p170 = scmp.le.s32.totalorder 1, %s13
      %p171 = scmp.lt.s32.totalorder %s13, 3
      %p172 = pnand %p170, %p171
      %p173 = pneg %p172
      // Predicated region
      $region29: #{_mlp_forward.1} parent=5 // pred_check
        _
      $region30: #{_mlp_forward.1} parent=5 // pred_check_branch
        %175 = sbr.rel (%p172) target = $region32
      $region31: #{_mlp_forward.1} parent=5 // pred_region
        %s176 = ssub.s32 %s13, 1
        %s177 = sand.u32 %s26, 1
        %s178 = scalar_lea.sflag [#allocation3], %s177
        %s179 = sand.u32 %s26, 1
        %s180 = smul.addr %s179, 8
        %s181 = scalar_lea.vmem [#allocation2], %s180
        // Predicated region
        $region33: #{_mlp_forward.1} parent=31 // pred_check
          %p182 = pneg %p39
        $region34: #{_mlp_forward.1} parent=31 // pred_check_branch
          %184 = sbr.rel (%p182) target = $region36
        $region35: #{_mlp_forward.1} parent=31 // pred_region
          %185 = dma.done %s178, 128
        $region36: #{_mlp_forward.1} parent=31 // pred_fallthru
          _
        // Predicated region
        $region37: #{_mlp_forward.1} parent=31 // pred_check
          %p186 = pneg %p60
        $region38: #{_mlp_forward.1} parent=31 // pred_check_branch
          %188 = sbr.rel (%p186) target = $region40
        $region39: #{_mlp_forward.1} parent=31 // pred_region
          %189 = dma.done [#allocation5], 6144
        $region40: #{_mlp_forward.1} parent=31 // pred_fallthru
          _
        // Predicated region
        $region41: #{_mlp_forward.1} parent=31 // pred_check
          %p190 = pneg %p81
        $region42: #{_mlp_forward.1} parent=31 // pred_check_branch
          %192 = sbr.rel (%p190) target = $region44
        $region43: #{_mlp_forward.1} parent=31 // pred_region
          %193 = dma.done [#allocation5], 96
        $region44: #{_mlp_forward.1} parent=31 // pred_fallthru
          _
        %s194 = sand.u32 %s26, 1
        %s195 = scalar_lea.sflag [#allocation3], %s194
        %s196 = sand.u32 %s26, 1
        %s197 = smul.addr %s196, 8
        %s198 = scalar_lea.vmem [#allocation2], %s197
        %p199 = pneg %p39
        %p200 = pneg %p36
        %p201 = pneg %p60
        %p202 = pneg %p57
        %p203 = pneg %p81
        %p204 = pneg %p78
        %p205 = pneg %p107
        %p206 = pneg %p104
        %p207 = scmp.lt.s32.totalorder %s18, 1
        %s208 = scalar_select %p207, %s18, 1
        %s209 = smul.addr %s208, 8
        %s210 = scalar_lea.vmem %s3, %s209
        %p211 = scmp.lt.s32.totalorder %s18, 1
        %s212 = scalar_select %p211, %s18, 1
        %s213 = smul.addr %s212, 8
        %s214 = scalar_lea.vmem %s3, %s213
        %v216 = vld [vmem:[%s181] sm:$0xff]
        %v217 = vld [vmem:[#allocation4] sm:$0xf]
        %v218 = vld [vmem:[#allocation4 + $0x4] sm:$0xf]
        %v219 = vpack.c.bf16 %v216, %v216
        %v220 = vld [vmem:[#allocation6] sm:$0x1]
        %v222 = vlaneseq
        %v223 = vshrl.u32 %v222, 7
        %v224 = vsub.s32 0, %v223
        %v225 = vrot.slane %v220, %v224
        %v229 = vunpack.c.l.b16 %v217
        %v230 = vunpack.c.l.b16 %v218
        %v231 = vpack.c.b16 %v230, %v229
        %vm233 = vcmask 130048
        %v235 = vsel %vm233, %v219, 0
        %237 = vmatprep.subr.bf16.mxu0 0
        %238 = vmatpush1.bf16.msra.mxu0 0
        %239 = vmatprep.subr.bf16.mxu0 0
        %240 = vmatpush1.bf16.msra.mxu0 0
        %241 = vmatprep.subr.bf16.mxu0 0
        %242 = vmatpush1.bf16.msra.mxu0 0
        %243 = vmatprep.subr.bf16.mxu0 0
        %244 = vmatpush1.bf16.msra.mxu0 0
        %245 = vmatprep.subr.bf16.mxu0 0
        %246 = vmatpush1.bf16.msra.mxu0 0
        %247 = vmatprep.subr.bf16.mxu0 0
        %248 = vmatpush1.bf16.msra.mxu0 0
        %249 = vmatprep.subr.bf16.mxu0 0
        %250 = vmatpush1.bf16.msra.mxu0 0
        %251 = vmatprep.subr.bf16.mxu0 0
        %252 = vmatpush1.bf16.msra.mxu0 %v231
        %253 = vmatprep.subr.bf16.mxu0 0
        %254 = vmatpush2.bf16.msra.mxu0 0
        %255 = vmatprep.subr.bf16.mxu0 0
        %256 = vmatpush2.bf16.msra.mxu0 0
        %257 = vmatprep.subr.bf16.mxu0 0
        %258 = vmatpush2.bf16.msra.mxu0 0
        %259 = vmatprep.subr.bf16.mxu0 0
        %260 = vmatpush2.bf16.msra.mxu0 0
        %261 = vmatprep.subr.bf16.mxu0 0
        %262 = vmatpush2.bf16.msra.mxu0 0
        %263 = vmatprep.subr.bf16.mxu0 0
        %264 = vmatpush2.bf16.msra.mxu0 0
        %265 = vmatprep.subr.bf16.mxu0 0
        %266 = vmatpush2.bf16.msra.mxu0 0
        %267 = vmatprep.subr.bf16.mxu0 0
        %268 = vmatpush2.bf16.msra.mxu0 0
        %269 = vmatprep.mubr.bf16.mxu0 0
        %270 = vmatmul.mubr.bf16.gmra.mxu0 %v235
        %v271 = vpop.f32.mrf.mxu0
        %v272 = vadd.f32 %v225, %v271
        %v273 = vpop.f32.mrf.mxu0
        %v274 = vpop.f32.mrf.mxu0
        %v275 = vpop.f32.mrf.mxu0
        %276 = vdwg.mxu0
        %v277 = vmax.f32 %v272, 0.0
        %s278 = scalar_lea.vmem [#allocation4], 64
        %v279 = vld [vmem:[%s278] sm:$0xf]
        %v280 = vld [vmem:[%s278 + $0x4] sm:$0xf]
        %v281 = vld [vmem:[%s278 + $0x8] sm:$0xf]
        %v282 = vld [vmem:[%s278 + $0xc] sm:$0xf]
        %v283 = vld [vmem:[%s278 + $0x10] sm:$0xf]
        %v284 = vld [vmem:[%s278 + $0x14] sm:$0xf]
        %v285 = vld [vmem:[%s278 + $0x18] sm:$0xf]
        %v286 = vld [vmem:[%s278 + $0x1c] sm:$0xf]
        %v287 = vld [vmem:[%s278 + $0x20] sm:$0xf]
        %v288 = vld [vmem:[%s278 + $0x24] sm:$0xf]
        %v289 = vld [vmem:[%s278 + $0x28] sm:$0xf]
        %v290 = vld [vmem:[%s278 + $0x2c] sm:$0xf]
        %v291 = vld [vmem:[%s278 + $0x30] sm:$0xf]
        %v292 = vld [vmem:[%s278 + $0x34] sm:$0xf]
        %v293 = vld [vmem:[%s278 + $0x38] sm:$0xf]
        %v294 = vld [vmem:[%s278 + $0x3c] sm:$0xf]
        %v295 = vpack.c.bf16 %v277, %v277
        %s296 = scalar_lea.vmem [#allocation6], 1
        %v297 = vld [vmem:[%s296] sm:$0x1]
        %v299 = vlaneseq
        %v300 = vshrl.u32 %v299, 7
        %v301 = vsub.s32 0, %v300
        %v302 = vrot.slane %v297, %v301
        %v320 = vunpack.c.l.b16 %v279
        %v321 = vunpack.c.l.b16 %v280
        %v322 = vunpack.c.l.b16 %v281
        %v323 = vunpack.c.l.b16 %v282
        %v324 = vunpack.c.l.b16 %v283
        %v325 = vunpack.c.l.b16 %v284
        %v326 = vunpack.c.l.b16 %v285
        %v327 = vunpack.c.l.b16 %v286
        %v328 = vunpack.c.l.b16 %v287
        %v329 = vunpack.c.l.b16 %v288
        %v330 = vunpack.c.l.b16 %v289
        %v331 = vunpack.c.l.b16 %v290
        %v332 = vunpack.c.l.b16 %v291
        %v333 = vunpack.c.l.b16 %v292
        %v334 = vunpack.c.l.b16 %v293
        %v335 = vunpack.c.l.b16 %v294
        %v336 = vpack.c.b16 %v321, %v320
        %v337 = vpack.c.b16 %v323, %v322
        %v338 = vpack.c.b16 %v325, %v324
        %v339 = vpack.c.b16 %v327, %v326
        %v340 = vpack.c.b16 %v329, %v328
        %v341 = vpack.c.b16 %v331, %v330
        %v342 = vpack.c.b16 %v333, %v332
        %v343 = vpack.c.b16 %v335, %v334
        %352 = vmatprep.subr.bf16.mxu0 0
        %353 = vmatpush1.bf16.msra.mxu0 %v343
        %354 = vmatprep.subr.bf16.mxu0 0
        %355 = vmatpush1.bf16.msra.mxu0 %v342
        %356 = vmatprep.subr.bf16.mxu0 0
        %357 = vmatpush1.bf16.msra.mxu0 %v341
        %358 = vmatprep.subr.bf16.mxu0 0
        %359 = vmatpush1.bf16.msra.mxu0 %v340
        %360 = vmatprep.subr.bf16.mxu0 0
        %361 = vmatpush1.bf16.msra.mxu0 %v339
        %362 = vmatprep.subr.bf16.mxu0 0
        %363 = vmatpush1.bf16.msra.mxu0 %v338
        %364 = vmatprep.subr.bf16.mxu0 0
        %365 = vmatpush1.bf16.msra.mxu0 %v337
        %366 = vmatprep.subr.bf16.mxu0 0
        %367 = vmatpush1.bf16.msra.mxu0 %v336
        %368 = vmatprep.subr.bf16.mxu0 0
        %369 = vmatpush2.bf16.msra.mxu0 0
        %370 = vmatprep.subr.bf16.mxu0 0
        %371 = vmatpush2.bf16.msra.mxu0 0
        %372 = vmatprep.subr.bf16.mxu0 0
        %373 = vmatpush2.bf16.msra.mxu0 0
        %374 = vmatprep.subr.bf16.mxu0 0
        %375 = vmatpush2.bf16.msra.mxu0 0
        %376 = vmatprep.subr.bf16.mxu0 0
        %377 = vmatpush2.bf16.msra.mxu0 0
        %378 = vmatprep.subr.bf16.mxu0 0
        %379 = vmatpush2.bf16.msra.mxu0 0
        %380 = vmatprep.subr.bf16.mxu0 0
        %381 = vmatpush2.bf16.msra.mxu0 0
        %382 = vmatprep.subr.bf16.mxu0 0
        %383 = vmatpush2.bf16.msra.mxu0 0
        %384 = vmatprep.mubr.bf16.mxu0 0
        %385 = vmatmul.mubr.bf16.gmra.mxu0 %v295
        %v386 = vpop.f32.mrf.mxu0
        %v387 = vadd.f32 %v302, %v386
        %v388 = vpop.f32.mrf.mxu0
        %v389 = vpop.f32.mrf.mxu0
        %v390 = vpop.f32.mrf.mxu0
        %391 = vdwg.mxu0
        %v392 = vmax.f32 %v387, 0.0
        %s393 = scalar_lea.vmem [#allocation4], 128
        %v394 = vld [vmem:[%s393] sm:$0xf]
        %v395 = vld [vmem:[%s393 + $0x4] sm:$0xf]
        %v396 = vld [vmem:[%s393 + $0x8] sm:$0xf]
        %v397 = vld [vmem:[%s393 + $0xc] sm:$0xf]
        %v398 = vld [vmem:[%s393 + $0x10] sm:$0xf]
        %v399 = vld [vmem:[%s393 + $0x14] sm:$0xf]
        %v400 = vld [vmem:[%s393 + $0x18] sm:$0xf]
        %v401 = vld [vmem:[%s393 + $0x1c] sm:$0xf]
        %v402 = vld [vmem:[%s393 + $0x20] sm:$0xf]
        %v403 = vld [vmem:[%s393 + $0x24] sm:$0xf]
        %v404 = vld [vmem:[%s393 + $0x28] sm:$0xf]
        %v405 = vld [vmem:[%s393 + $0x2c] sm:$0xf]
        %v406 = vld [vmem:[%s393 + $0x30] sm:$0xf]
        %v407 = vld [vmem:[%s393 + $0x34] sm:$0xf]
        %v408 = vld [vmem:[%s393 + $0x38] sm:$0xf]
        %v409 = vld [vmem:[%s393 + $0x3c] sm:$0xf]
        %v410 = vpack.c.bf16 %v392, %v392
        %s411 = scalar_lea.vmem [#allocation6], 2
        %v412 = vld [vmem:[%s411] sm:$0x1]
        %v414 = vlaneseq
        %v415 = vshrl.u32 %v414, 7
        %v416 = vsub.s32 0, %v415
        %v417 = vrot.slane %v412, %v416
        %v435 = vunpack.c.l.b16 %v394
        %v436 = vunpack.c.l.b16 %v395
        %v437 = vunpack.c.l.b16 %v396
        %v438 = vunpack.c.l.b16 %v397
        %v439 = vunpack.c.l.b16 %v398
        %v440 = vunpack.c.l.b16 %v399
        %v441 = vunpack.c.l.b16 %v400
        %v442 = vunpack.c.l.b16 %v401
        %v443 = vunpack.c.l.b16 %v402
        %v444 = vunpack.c.l.b16 %v403
        %v445 = vunpack.c.l.b16 %v404
        %v446 = vunpack.c.l.b16 %v405
        %v447 = vunpack.c.l.b16 %v406
        %v448 = vunpack.c.l.b16 %v407
        %v449 = vunpack.c.l.b16 %v408
        %v450 = vunpack.c.l.b16 %v409
        %v451 = vpack.c.b16 %v436, %v435
        %v452 = vpack.c.b16 %v438, %v437
        %v453 = vpack.c.b16 %v440, %v439
        %v454 = vpack.c.b16 %v442, %v441
        %v455 = vpack.c.b16 %v444, %v443
        %v456 = vpack.c.b16 %v446, %v445
        %v457 = vpack.c.b16 %v448, %v447
        %v458 = vpack.c.b16 %v450, %v449
        %467 = vmatprep.subr.bf16.mxu0 0
        %468 = vmatpush1.bf16.msra.mxu0 %v458
        %469 = vmatprep.subr.bf16.mxu0 0
        %470 = vmatpush1.bf16.msra.mxu0 %v457
        %471 = vmatprep.subr.bf16.mxu0 0
        %472 = vmatpush1.bf16.msra.mxu0 %v456
        %473 = vmatprep.subr.bf16.mxu0 0
        %474 = vmatpush1.bf16.msra.mxu0 %v455
        %475 = vmatprep.subr.bf16.mxu0 0
        %476 = vmatpush1.bf16.msra.mxu0 %v454
        %477 = vmatprep.subr.bf16.mxu0 0
        %478 = vmatpush1.bf16.msra.mxu0 %v453
        %479 = vmatprep.subr.bf16.mxu0 0
        %480 = vmatpush1.bf16.msra.mxu0 %v452
        %481 = vmatprep.subr.bf16.mxu0 0
        %482 = vmatpush1.bf16.msra.mxu0 %v451
        %483 = vmatprep.subr.bf16.mxu0 0
        %484 = vmatpush2.bf16.msra.mxu0 0
        %485 = vmatprep.subr.bf16.mxu0 0
        %486 = vmatpush2.bf16.msra.mxu0 0
        %487 = vmatprep.subr.bf16.mxu0 0
        %488 = vmatpush2.bf16.msra.mxu0 0
        %489 = vmatprep.subr.bf16.mxu0 0
        %490 = vmatpush2.bf16.msra.mxu0 0
        %491 = vmatprep.subr.bf16.mxu0 0
        %492 = vmatpush2.bf16.msra.mxu0 0
        %493 = vmatprep.subr.bf16.mxu0 0
        %494 = vmatpush2.bf16.msra.mxu0 0
        %495 = vmatprep.subr.bf16.mxu0 0
        %496 = vmatpush2.bf16.msra.mxu0 0
        %497 = vmatprep.subr.bf16.mxu0 0
        %498 = vmatpush2.bf16.msra.mxu0 0
        %499 = vmatprep.mubr.bf16.mxu0 0
        %500 = vmatmul.mubr.bf16.gmra.mxu0 %v410
        %v501 = vpop.f32.mrf.mxu0
        %v502 = vadd.f32 %v417, %v501
        %v503 = vpop.f32.mrf.mxu0
        %v504 = vpop.f32.mrf.mxu0
        %v505 = vpop.f32.mrf.mxu0
        %506 = vdwg.mxu0
        %v507 = vtanh.pop %v502
        %s508 = scalar_lea.vmem [#allocation4], 192
        %v509 = vld [vmem:[%s508] sm:$0xf]
        %v510 = vld [vmem:[%s508 + $0x4] sm:$0xf]
        %v511 = vld [vmem:[%s508 + $0x8] sm:$0xf]
        %v512 = vld [vmem:[%s508 + $0xc] sm:$0xf]
        %v513 = vld [vmem:[%s508 + $0x10] sm:$0xf]
        %v514 = vld [vmem:[%s508 + $0x14] sm:$0xf]
        %v515 = vld [vmem:[%s508 + $0x18] sm:$0xf]
        %v516 = vld [vmem:[%s508 + $0x1c] sm:$0xf]
        %v517 = vld [vmem:[%s508 + $0x20] sm:$0xf]
        %v518 = vld [vmem:[%s508 + $0x24] sm:$0xf]
        %v519 = vld [vmem:[%s508 + $0x28] sm:$0xf]
        %v520 = vld [vmem:[%s508 + $0x2c] sm:$0xf]
        %v521 = vld [vmem:[%s508 + $0x30] sm:$0xf]
        %v522 = vld [vmem:[%s508 + $0x34] sm:$0xf]
        %v523 = vld [vmem:[%s508 + $0x38] sm:$0xf]
        %v524 = vld [vmem:[%s508 + $0x3c] sm:$0xf]
        %v525 = vpack.c.bf16 %v507, %v507
        %s526 = scalar_lea.vmem [#allocation6], 3
        %v527 = vld [vmem:[%s526] sm:$0x1]
        %v529 = vlaneseq
        %v530 = vshrl.u32 %v529, 7
        %v531 = vsub.s32 0, %v530
        %v532 = vrot.slane %v527, %v531
        %v550 = vunpack.c.l.b16 %v509
        %v551 = vunpack.c.l.b16 %v510
        %v552 = vunpack.c.l.b16 %v511
        %v553 = vunpack.c.l.b16 %v512
        %v554 = vunpack.c.l.b16 %v513
        %v555 = vunpack.c.l.b16 %v514
        %v556 = vunpack.c.l.b16 %v515
        %v557 = vunpack.c.l.b16 %v516
        %v558 = vunpack.c.l.b16 %v517
        %v559 = vunpack.c.l.b16 %v518
        %v560 = vunpack.c.l.b16 %v519
        %v561 = vunpack.c.l.b16 %v520
        %v562 = vunpack.c.l.b16 %v521
        %v563 = vunpack.c.l.b16 %v522
        %v564 = vunpack.c.l.b16 %v523
        %v565 = vunpack.c.l.b16 %v524
        %v566 = vpack.c.b16 %v551, %v550
        %v567 = vpack.c.b16 %v553, %v552
        %v568 = vpack.c.b16 %v555, %v554
        %v569 = vpack.c.b16 %v557, %v556
        %v570 = vpack.c.b16 %v559, %v558
        %v571 = vpack.c.b16 %v561, %v560
        %v572 = vpack.c.b16 %v563, %v562
        %v573 = vpack.c.b16 %v565, %v564
        %582 = vmatprep.subr.bf16.mxu0 0
        %583 = vmatpush1.bf16.msra.mxu0 %v573
        %584 = vmatprep.subr.bf16.mxu0 0
        %585 = vmatpush1.bf16.msra.mxu0 %v572
        %586 = vmatprep.subr.bf16.mxu0 0
        %587 = vmatpush1.bf16.msra.mxu0 %v571
        %588 = vmatprep.subr.bf16.mxu0 0
        %589 = vmatpush1.bf16.msra.mxu0 %v570
        %590 = vmatprep.subr.bf16.mxu0 0
        %591 = vmatpush1.bf16.msra.mxu0 %v569
        %592 = vmatprep.subr.bf16.mxu0 0
        %593 = vmatpush1.bf16.msra.mxu0 %v568
        %594 = vmatprep.subr.bf16.mxu0 0
        %595 = vmatpush1.bf16.msra.mxu0 %v567
        %596 = vmatprep.subr.bf16.mxu0 0
        %597 = vmatpush1.bf16.msra.mxu0 %v566
        %598 = vmatprep.subr.bf16.mxu0 0
        %599 = vmatpush2.bf16.msra.mxu0 0
        %600 = vmatprep.subr.bf16.mxu0 0
        %601 = vmatpush2.bf16.msra.mxu0 0
        %602 = vmatprep.subr.bf16.mxu0 0
        %603 = vmatpush2.bf16.msra.mxu0 0
        %604 = vmatprep.subr.bf16.mxu0 0
        %605 = vmatpush2.bf16.msra.mxu0 0
        %606 = vmatprep.subr.bf16.mxu0 0
        %607 = vmatpush2.bf16.msra.mxu0 0
        %608 = vmatprep.subr.bf16.mxu0 0
        %609 = vmatpush2.bf16.msra.mxu0 0
        %610 = vmatprep.subr.bf16.mxu0 0
        %611 = vmatpush2.bf16.msra.mxu0 0
        %612 = vmatprep.subr.bf16.mxu0 0
        %613 = vmatpush2.bf16.msra.mxu0 0
        %614 = vmatprep.mubr.bf16.mxu0 0
        %615 = vmatmul.mubr.bf16.gmra.mxu0 %v525
        %v616 = vpop.f32.mrf.mxu0
        %v617 = vadd.f32 %v532, %v616
        %v618 = vpop.f32.mrf.mxu0
        %v619 = vpop.f32.mrf.mxu0
        %v620 = vpop.f32.mrf.mxu0
        %621 = vdwg.mxu0
        %v622 = vmax.f32 %v617, 0.0
        %s623 = scalar_lea.vmem [#allocation4], 256
        %v624 = vld [vmem:[%s623] sm:$0xf]
        %v625 = vld [vmem:[%s623 + $0x4] sm:$0xf]
        %v626 = vld [vmem:[%s623 + $0x8] sm:$0xf]
        %v627 = vld [vmem:[%s623 + $0xc] sm:$0xf]
        %v628 = vld [vmem:[%s623 + $0x10] sm:$0xf]
        %v629 = vld [vmem:[%s623 + $0x14] sm:$0xf]
        %v630 = vld [vmem:[%s623 + $0x18] sm:$0xf]
        %v631 = vld [vmem:[%s623 + $0x1c] sm:$0xf]
        %v632 = vld [vmem:[%s623 + $0x20] sm:$0xf]
        %v633 = vld [vmem:[%s623 + $0x24] sm:$0xf]
        %v634 = vld [vmem:[%s623 + $0x28] sm:$0xf]
        %v635 = vld [vmem:[%s623 + $0x2c] sm:$0xf]
        %v636 = vld [vmem:[%s623 + $0x30] sm:$0xf]
        %v637 = vld [vmem:[%s623 + $0x34] sm:$0xf]
        %v638 = vld [vmem:[%s623 + $0x38] sm:$0xf]
        %v639 = vld [vmem:[%s623 + $0x3c] sm:$0xf]
        %v640 = vpack.c.bf16 %v622, %v622
        %s641 = scalar_lea.vmem [#allocation6], 4
        %v642 = vld [vmem:[%s641] sm:$0x1]
        %v644 = vlaneseq
        %v645 = vshrl.u32 %v644, 7
        %v646 = vsub.s32 0, %v645
        %v647 = vrot.slane %v642, %v646
        %v665 = vunpack.c.l.b16 %v624
        %v666 = vunpack.c.l.b16 %v625
        %v667 = vunpack.c.l.b16 %v626
        %v668 = vunpack.c.l.b16 %v627
        %v669 = vunpack.c.l.b16 %v628
        %v670 = vunpack.c.l.b16 %v629
        %v671 = vunpack.c.l.b16 %v630
        %v672 = vunpack.c.l.b16 %v631
        %v673 = vunpack.c.l.b16 %v632
        %v674 = vunpack.c.l.b16 %v633
        %v675 = vunpack.c.l.b16 %v634
        %v676 = vunpack.c.l.b16 %v635
        %v677 = vunpack.c.l.b16 %v636
        %v678 = vunpack.c.l.b16 %v637
        %v679 = vunpack.c.l.b16 %v638
        %v680 = vunpack.c.l.b16 %v639
        %v681 = vpack.c.b16 %v666, %v665
        %v682 = vpack.c.b16 %v668, %v667
        %v683 = vpack.c.b16 %v670, %v669
        %v684 = vpack.c.b16 %v672, %v671
        %v685 = vpack.c.b16 %v674, %v673
        %v686 = vpack.c.b16 %v676, %v675
        %v687 = vpack.c.b16 %v678, %v677
        %v688 = vpack.c.b16 %v680, %v679
        %697 = vmatprep.subr.bf16.mxu0 0
        %698 = vmatpush1.bf16.msra.mxu0 %v688
        %699 = vmatprep.subr.bf16.mxu0 0
        %700 = vmatpush1.bf16.msra.mxu0 %v687
        %701 = vmatprep.subr.bf16.mxu0 0
        %702 = vmatpush1.bf16.msra.mxu0 %v686
        %703 = vmatprep.subr.bf16.mxu0 0
        %704 = vmatpush1.bf16.msra.mxu0 %v685
        %705 = vmatprep.subr.bf16.mxu0 0
        %706 = vmatpush1.bf16.msra.mxu0 %v684
        %707 = vmatprep.subr.bf16.mxu0 0
        %708 = vmatpush1.bf16.msra.mxu0 %v683
        %709 = vmatprep.subr.bf16.mxu0 0
        %710 = vmatpush1.bf16.msra.mxu0 %v682
        %711 = vmatprep.subr.bf16.mxu0 0
        %712 = vmatpush1.bf16.msra.mxu0 %v681
        %713 = vmatprep.subr.bf16.mxu0 0
        %714 = vmatpush2.bf16.msra.mxu0 0
        %715 = vmatprep.subr.bf16.mxu0 0
        %716 = vmatpush2.bf16.msra.mxu0 0
        %717 = vmatprep.subr.bf16.mxu0 0
        %718 = vmatpush2.bf16.msra.mxu0 0
        %719 = vmatprep.subr.bf16.mxu0 0
        %720 = vmatpush2.bf16.msra.mxu0 0
        %721 = vmatprep.subr.bf16.mxu0 0
        %722 = vmatpush2.bf16.msra.mxu0 0
        %723 = vmatprep.subr.bf16.mxu0 0
        %724 = vmatpush2.bf16.msra.mxu0 0
        %725 = vmatprep.subr.bf16.mxu0 0
        %726 = vmatpush2.bf16.msra.mxu0 0
        %727 = vmatprep.subr.bf16.mxu0 0
        %728 = vmatpush2.bf16.msra.mxu0 0
        %729 = vmatprep.mubr.bf16.mxu0 0
        %730 = vmatmul.mubr.bf16.gmra.mxu0 %v640
        %v731 = vpop.f32.mrf.mxu0
        %v732 = vadd.f32 %v647, %v731
        %v733 = vpop.f32.mrf.mxu0
        %v734 = vpop.f32.mrf.mxu0
        %v735 = vpop.f32.mrf.mxu0
        %736 = vdwg.mxu0
        %v737 = vmax.f32 %v732, 0.0
        %s738 = scalar_lea.vmem [#allocation4], 320
        %v739 = vld [vmem:[%s738] sm:$0xf]
        %v740 = vld [vmem:[%s738 + $0x4] sm:$0xf]
        %v741 = vld [vmem:[%s738 + $0x8] sm:$0xf]
        %v742 = vld [vmem:[%s738 + $0xc] sm:$0xf]
        %v743 = vld [vmem:[%s738 + $0x10] sm:$0xf]
        %v744 = vld [vmem:[%s738 + $0x14] sm:$0xf]
        %v745 = vld [vmem:[%s738 + $0x18] sm:$0xf]
        %v746 = vld [vmem:[%s738 + $0x1c] sm:$0xf]
        %v747 = vld [vmem:[%s738 + $0x20] sm:$0xf]
        %v748 = vld [vmem:[%s738 + $0x24] sm:$0xf]
        %v749 = vld [vmem:[%s738 + $0x28] sm:$0xf]
        %v750 = vld [vmem:[%s738 + $0x2c] sm:$0xf]
        %v751 = vld [vmem:[%s738 + $0x30] sm:$0xf]
        %v752 = vld [vmem:[%s738 + $0x34] sm:$0xf]
        %v753 = vld [vmem:[%s738 + $0x38] sm:$0xf]
        %v754 = vld [vmem:[%s738 + $0x3c] sm:$0xf]
        %v755 = vpack.c.bf16 %v737, %v737
        %s756 = scalar_lea.vmem [#allocation6], 5
        %v757 = vld [vmem:[%s756] sm:$0x1]
        %v759 = vlaneseq
        %v760 = vshrl.u32 %v759, 7
        %v761 = vsub.s32 0, %v760
        %v762 = vrot.slane %v757, %v761
        %v780 = vunpack.c.l.b16 %v739
        %v781 = vunpack.c.l.b16 %v740
        %v782 = vunpack.c.l.b16 %v741
        %v783 = vunpack.c.l.b16 %v742
        %v784 = vunpack.c.l.b16 %v743
        %v785 = vunpack.c.l.b16 %v744
        %v786 = vunpack.c.l.b16 %v745
        %v787 = vunpack.c.l.b16 %v746
        %v788 = vunpack.c.l.b16 %v747
        %v789 = vunpack.c.l.b16 %v748
        %v790 = vunpack.c.l.b16 %v749
        %v791 = vunpack.c.l.b16 %v750
        %v792 = vunpack.c.l.b16 %v751
        %v793 = vunpack.c.l.b16 %v752
        %v794 = vunpack.c.l.b16 %v753
        %v795 = vunpack.c.l.b16 %v754
        %v796 = vpack.c.b16 %v781, %v780
        %v797 = vpack.c.b16 %v783, %v782
        %v798 = vpack.c.b16 %v785, %v784
        %v799 = vpack.c.b16 %v787, %v786
        %v800 = vpack.c.b16 %v789, %v788
        %v801 = vpack.c.b16 %v791, %v790
        %v802 = vpack.c.b16 %v793, %v792
        %v803 = vpack.c.b16 %v795, %v794
        %812 = vmatprep.subr.bf16.mxu0 0
        %813 = vmatpush1.bf16.msra.mxu0 %v803
        %814 = vmatprep.subr.bf16.mxu0 0
        %815 = vmatpush1.bf16.msra.mxu0 %v802
        %816 = vmatprep.subr.bf16.mxu0 0
        %817 = vmatpush1.bf16.msra.mxu0 %v801
        %818 = vmatprep.subr.bf16.mxu0 0
        %819 = vmatpush1.bf16.msra.mxu0 %v800
        %820 = vmatprep.subr.bf16.mxu0 0
        %821 = vmatpush1.bf16.msra.mxu0 %v799
        %822 = vmatprep.subr.bf16.mxu0 0
        %823 = vmatpush1.bf16.msra.mxu0 %v798
        %824 = vmatprep.subr.bf16.mxu0 0
        %825 = vmatpush1.bf16.msra.mxu0 %v797
        %826 = vmatprep.subr.bf16.mxu0 0
        %827 = vmatpush1.bf16.msra.mxu0 %v796
        %828 = vmatprep.subr.bf16.mxu0 0
        %829 = vmatpush2.bf16.msra.mxu0 0
        %830 = vmatprep.subr.bf16.mxu0 0
        %831 = vmatpush2.bf16.msra.mxu0 0
        %832 = vmatprep.subr.bf16.mxu0 0
        %833 = vmatpush2.bf16.msra.mxu0 0
        %834 = vmatprep.subr.bf16.mxu0 0
        %835 = vmatpush2.bf16.msra.mxu0 0
        %836 = vmatprep.subr.bf16.mxu0 0
        %837 = vmatpush2.bf16.msra.mxu0 0
        %838 = vmatprep.subr.bf16.mxu0 0
        %839 = vmatpush2.bf16.msra.mxu0 0
        %840 = vmatprep.subr.bf16.mxu0 0
        %841 = vmatpush2.bf16.msra.mxu0 0
        %842 = vmatprep.subr.bf16.mxu0 0
        %843 = vmatpush2.bf16.msra.mxu0 0
        %844 = vmatprep.mubr.bf16.mxu0 0
        %845 = vmatmul.mubr.bf16.gmra.mxu0 %v755
        %v846 = vpop.f32.mrf.mxu0
        %v847 = vadd.f32 %v762, %v846
        %v848 = vpop.f32.mrf.mxu0
        %v849 = vpop.f32.mrf.mxu0
        %v850 = vpop.f32.mrf.mxu0
        %851 = vdwg.mxu0
        %v852 = vtanh.pop %v847
        %vm853 = vcmask 64512
        %854 = vst.msk [vmem:[%s214] sm:$0xff] %vm853, %v852
        %p855 = scmp.lt.s32.totalorder %s18, 1
        %s856 = scalar_select %p855, %s18, 1
        %s857 = smul.addr %s856, 8
        %s858 = scalar_lea.vmem %s3, %s857
        // Predicated region
        $region45: #{_mlp_forward.1} parent=31 // pred_check
          %p859 = pneg %p104
        $region46: #{_mlp_forward.1} parent=31 // pred_check_branch
          %861 = sbr.rel (%p859) target = $region48
        $region47: #{_mlp_forward.1} parent=31 // pred_region
          _
        $region48: #{_mlp_forward.1} parent=31 // pred_fallthru
          _
      $region32: #{_mlp_forward.1} parent=5 // pred_fallthru
        _
      %p862 = scmp.le.s32.totalorder 2, %s13
      // Predicated region
      $region49: #{_mlp_forward.1} parent=5 // pred_check
        %p863 = pneg %p862
      $region50: #{_mlp_forward.1} parent=5 // pred_check_branch
        %865 = sbr.rel (%p863) target = $region52
      $region51: #{_mlp_forward.1} parent=5 // pred_region
        %s866 = ssub.s32 %s13, 2
        // Predicated region
        $region53: #{_mlp_forward.1} parent=51 // pred_check
          %p867 = pneg %p110
        $region54: #{_mlp_forward.1} parent=51 // pred_check_branch
          %869 = sbr.rel (%p867) target = $region56
        $region55: #{_mlp_forward.1} parent=51 // pred_region
          %p870 = scmp.lt.s32.totalorder %s19, 1
          %s871 = scalar_select %p870, %s19, 1
          %s872 = smul.addr %s871, 8
          %s873 = scalar_lea.vmem %s3, %s872
        $region56: #{_mlp_forward.1} parent=51 // pred_fallthru
          _
      $region52: #{_mlp_forward.1} parent=5 // pred_fallthru
        _
    $region6: #{_mlp_forward.1} parent=1 // loop_footer
      %s17 = sadd.s32 1, %s13
    $region7: #{_mlp_forward.1} parent=1 // loop_footer_branch
      %12 = sbr.rel target = $region3
    $region8: #{_mlp_forward.1} parent=1 // loop_exit
      _
    %874 = vsyncpa [#allocation3], 1
    %s875 = scalar_lea.sflag [#allocation3], 1
    %876 = vsyncpa %s875, 1
    %877 = vsyncpa [#allocation5], 1

</llo_original>
